<compile_context>
chip_gen: v7x
topology: tpu7x:2x2x1
jax: 0.10.0
libtpu: 0.0.40
codegen_flags: <defaults>
</compile_context>

<pallas_src>
import jax
import jax.numpy as jnp
from jax import lax
from jax.experimental import pallas as pl
from jax.experimental.pallas import tpu as pltpu

_SUB = 8                                   # sublanes per vreg / row-group size
_LANES = 128                               # lanes per vreg
_ACC_W = 512                               # accumulator lane width (4 f32 vregs)
_TILE_BYTES_TARGET = 16 * 1024 * 1024      # per input buffer; x2 (double-buffered)
_VMEM_LIMIT_BYTES = 48 * 1024 * 1024       # < v7x 64 MiB physical; mandatory on v5e (16 MiB default)


def _round_up(x: int, m: int) -> int:
    return ((x + m - 1) // m) * m


def _make_l1_block_kernel(*, rows, cols, br, nb, acc_w, n_chunks, rem, out_w):
    """Kernel computing a per-row-block (8, out_w) f32 slab of partial |x| sums."""
    groups_full = br // _SUB                    # 8-row groups in a full block
    vr_last = rows - (nb - 1) * br              # valid rows in the last block
    fg_last = vr_last // _SUB                   # full 8-row groups in the last block
    pr_last = vr_last % _SUB                    # ragged rows in the last block
    acc_vregs = max(1, acc_w // _LANES)

    def _partials(x_ref, n_groups, partial_rows):
        # Lane mask for the ragged column remainder: the remainder is read as the
        # clamped window [cols - acc_w, cols) and only the last `rem` lanes
        # (global columns >= n_chunks*acc_w) are kept, so acc_w stays 128-aligned.
        col_keep = None
        if rem:
            col_keep = lax.broadcasted_iota(jnp.int32, (_SUB, acc_w), 1) >= (acc_w - rem)

        def add_group(base, acc, row_keep=None):
            # One 8-row group: stream acc_w-wide chunks, abs -> f32 -> accumulate.
            # f32 input: 2 VALU ops/element (abs + add); bf16 adds one convert.
            # TODO(synk): on v7x with bf16 inputs the 3rd VALU op can bind before
            # HBM; offloading the row fold to the idle MXU (ones @ |x|) would fix
            # that, but on v5e/v6e the VPU has ample slack so the VPU path is kept.
            def absf(chunk):
                a = jnp.abs(chunk).astype(jnp.float32)
                if row_keep is not None:
                    a = jnp.where(row_keep, a, 0.0)
                return a

            for c in range(n_chunks):
                acc = acc + absf(x_ref[pl.ds(base, _SUB), pl.ds(c * acc_w, acc_w)])
            if rem:
                tail = absf(x_ref[pl.ds(base, _SUB), pl.ds(cols - acc_w, acc_w)])
                acc = acc + jnp.where(col_keep, tail, 0.0)
            return acc

        acc = jnp.zeros((_SUB, acc_w), jnp.float32)

        if n_groups > 0:
            # Vreg-resident accumulator carried through the loop; unroll small
            # bodies so the LLO scheduler can hide load/VALU latency.
            unroll = max(1, min(n_groups, 16 // max(1, n_chunks * acc_vregs)))
            acc = lax.fori_loop(
                0, n_groups,
                lambda g, a: add_group(pl.multiple_of(g * _SUB, _SUB), a),
                acc, unroll=unroll)

        if partial_rows:
            # Ragged tail rows of the last block: rows >= `rows` were never
            # DMA'd (garbage), masked out with a sublane-iota compare (select is
            # NaN-safe).
            row_keep = lax.broadcasted_iota(jnp.int32, (_SUB, acc_w), 0) < partial_rows
            acc = add_group(n_groups * _SUB, acc, row_keep=row_keep)

        # Fold lanes down to (8, out_w) with plain VPU adds on static vreg slices.
        out = acc[:, :out_w]
        for s in range(out_w, acc_w, out_w):
            out = out + acc[:, s:s + out_w]
        return out

    def kernel(x_ref, o_ref):
        if nb == 1:
            o_ref[...] = _partials(x_ref, fg_last, pr_last)
        elif fg_last == groups_full and pr_last == 0:
            # Rows divide evenly into blocks: single code path, no masking at all.
            o_ref[...] = _partials(x_ref, groups_full, 0)
        else:
            pid = pl.program_id(0)

            @pl.when(pid < nb - 1)
            def _():
                o_ref[...] = _partials(x_ref, groups_full, 0)

            @pl.when(pid == nb - 1)
            def _():
                o_ref[...] = _partials(x_ref, fg_last, pr_last)

    return kernel


def _l1_partial_sums(x, *, tile_bytes=_TILE_BYTES_TARGET):
    """Small lane-dense f32 slab whose total equals sum(|x|); single HBM pass."""
    assert x.ndim == 2, "L1Regularizer expects a two dimensional input tensor"
    rows, cols = x.shape
    assert rows >= 1 and cols >= 1

    # Corner case: fewer than 8 rows cannot form a legal (8, .) block window.
    # Pad rows up to 8 (zeros add nothing to sum|x|); columns are never padded.
    if rows < _SUB:
        x = jnp.pad(x, ((0, _SUB - rows), (0, 0)))
        rows = _SUB

    # Column chunking for the vreg-resident accumulator.
    if cols < _LANES:
        acc_w, n_chunks, rem, out_w = cols, 1, 0, cols
    else:
        acc_w = min(_ACC_W, (cols // _LANES) * _LANES)
        n_chunks, rem, out_w = cols // acc_w, cols % acc_w, _LANES

    # Row blocking: largest multiple-of-8 row tile under the VMEM budget, sized
    # on the physical lane-padded footprint (so narrow-hidden inputs still get
    # big tiles), capped so every block starts inside the array, then rebalanced
    # so blocks are roughly equal.  No hard row cap.
    itemsize = jnp.dtype(x.dtype).itemsize
    cols_phys = _round_up(cols, _LANES)
    br = tile_bytes // (cols_phys * itemsize)
    br = max(_SUB, (br // _SUB) * _SUB)
    br = min(br, (rows // _SUB) * _SUB)
    nb = pl.cdiv(rows, br)
    br = min(br, _round_up(pl.cdiv(rows, nb), _SUB))
    nb = pl.cdiv(rows, br)

    kernel = _make_l1_block_kernel(rows=rows, cols=cols, br=br, nb=nb,
                                   acc_w=acc_w, n_chunks=n_chunks, rem=rem,
                                   out_w=out_w)
    return pl.pallas_call(
        kernel,
        out_shape=jax.ShapeDtypeStruct((nb * _SUB, out_w), jnp.float32),
        grid_spec=pltpu.PrefetchScalarGridSpec(
            num_scalar_prefetch=0,
            grid=(nb,),
            in_specs=[pl.BlockSpec((br, cols), lambda i: (i, 0))],
            out_specs=pl.BlockSpec((_SUB, out_w), lambda i: (i, 0)),
        ),
        compiler_params=pltpu.CompilerParams(
            dimension_semantics=("parallel",),      # one slab per block: race-free
            vmem_limit_bytes=_VMEM_LIMIT_BYTES,
        ),
    )(x)


@jax.jit
def l1_regularization(reps, current_alpha):
    """current_alpha * sum(|reps|) / reps.shape[0], with the reduction in Pallas."""
    partials = _l1_partial_sums(reps)             # tiny (nb*8, <=128) f32 slab
    total = jnp.sum(partials)                     # negligible XLA epilogue
    alpha = jnp.asarray(current_alpha, dtype=jnp.float32)
    return alpha * total / reps.shape[0]


class L1Regularizer:
    """JAX/Pallas port of neural_ir.models.sparse_encoder.L1Regularizer."""

    def __init__(self, T: int = 5000, alpha: float = 0.01):
        self.T = T
        self.max_alpha = alpha
        self.current_step = 0
        self.current_alpha = 0.0

    def __call__(self, reps):
        # current_alpha is passed as a *traced* scalar so jit never freezes the
        # warm-up schedule into the compiled graph.
        l1 = l1_regularization(reps, jnp.asarray(self.current_alpha, jnp.float32))
        self.step()
        return l1

    def step(self):
        # Warm-up schedule: pure Python scalar state, no tensor compute to port.
        if self.current_step < self.T:
            self.current_step += 1
            self.current_alpha = (self.current_step / self.T) ** 2 * self.max_alpha


if __name__ == "__main__":
    key = jax.random.PRNGKey(0)
    reg = L1Regularizer(T=5000, alpha=0.01)
    ok = True

    # Module path + direct-kernel numeric checks:
    #   (8, 384): aligned rows/cols, single block
    #   (6, 200): rows < 8 (tiny row pad) + ragged column remainder masking
    for shape in [(8, 384), (6, 200)]:
        key, sub = jax.random.split(key)
        reps = jax.random.normal(sub, shape, dtype=jnp.float32)

        expected_module = reg.current_alpha * jnp.sum(jnp.abs(reps)) / shape[0]
        out = jax.block_until_ready(reg(reps))
        ok &= bool(jnp.allclose(out, expected_module, rtol=1e-5, atol=1e-6))

        ref = 0.5 * jnp.sum(jnp.abs(reps)) / shape[0]
        got = jax.block_until_ready(l1_regularization(reps, jnp.float32(0.5)))
        ok &= bool(jnp.allclose(got, ref, rtol=1e-5, atol=1e-6))

    # Multi-block grid with a ragged last row block (exercises both pl.when
    # paths, the fori_loop and the masked partial row group) — forced on a
    # small shape via a tiny tile budget.
    key, sub = jax.random.split(key)
    reps3 = jax.random.normal(sub, (20, 384), dtype=jnp.float32)
    partial = jax.block_until_ready(_l1_partial_sums(reps3, tile_bytes=16 * 1024))
    ok &= bool(jnp.allclose(jnp.sum(partial), jnp.sum(jnp.abs(reps3)),
                            rtol=1e-5, atol=1e-4))

    # bf16 input path (abs -> f32 streaming accumulate, no f32 tile copy).
    key, sub = jax.random.split(key)
    reps4 = jax.random.normal(sub, (16, 256), dtype=jnp.bfloat16)
    got4 = jax.block_until_ready(l1_regularization(reps4, jnp.float32(1.0)))
    ref4 = jnp.sum(jnp.abs(reps4.astype(jnp.float32))) / 16
    ok &= bool(jnp.allclose(got4, ref4, rtol=5e-3, atol=1e-3))

    # Warm-up schedule advanced twice (once per module call) and was not baked
    # into the jit trace.
    ok &= reg.current_step == 2
    ok &= abs(reg.current_alpha - (2 / 5000) ** 2 * 0.01) < 1e-12

    if not ok:
        raise SystemExit("kernel result mismatch")
    print("KERNEL_OK")
</pallas_src>

<mosaic_0001>
module attributes {stable_mosaic.version = 11 : i64} {
  func.func @kernel(%arg0: i32, %arg1: memref<8x384xf32, #tpu.memory_space<vmem>>, %arg2: memref<8x128xf32, #tpu.memory_space<vmem>>) attributes {dimension_semantics = [#tpu.dimension_semantics<parallel>], iteration_bounds = array<i64: 1>, scalar_prefetch = 0 : i64, scratch_operands = 0 : i64, tpu.core_type = #tpu.core_type<tc>, window_params = [{transform_indices = @transform_0, window_bounds = array<i64: 8, 384>}, {transform_indices = @transform_1, window_bounds = array<i64: 8, 128>}]} {
    %cst = arith.constant 0.000000e+00 : f32
    %0 = vector.broadcast %cst : f32 to vector<8x384xf32>
    %c0_i32 = arith.constant 0 : i32
    %c8_i32 = arith.constant 8 : i32
    %1 = arith.muli %c0_i32, %c8_i32 : i32
    %2 = tpu.assume_multiple %1, 8 : i32
    %3 = arith.index_cast %2 : i32 to index
    %c0 = arith.constant 0 : index
    %4 = vector.load %arg1[%3, %c0] : memref<8x384xf32, #tpu.memory_space<vmem>>, vector<8x384xf32>
    %5 = math.absf %4 : vector<8x384xf32>
    %6 = arith.addf %0, %5 : vector<8x384xf32>
    %c1_i32 = arith.constant 1 : i32
    %7 = vector.extract_strided_slice %6 {offsets = [0, 0], sizes = [8, 128], strides = [1, 1]} : vector<8x384xf32> to vector<8x128xf32>
    %8 = vector.extract_strided_slice %6 {offsets = [0, 128], sizes = [8, 128], strides = [1, 1]} : vector<8x384xf32> to vector<8x128xf32>
    %9 = arith.addf %7, %8 : vector<8x128xf32>
    %10 = vector.extract_strided_slice %6 {offsets = [0, 256], sizes = [8, 128], strides = [1, 1]} : vector<8x384xf32> to vector<8x128xf32>
    %11 = arith.addf %9, %10 : vector<8x128xf32>
    %c0_0 = arith.constant 0 : index
    %c0_1 = arith.constant 0 : index
    %12 = vector.load %arg2[%c0_0, %c0_1] : memref<8x128xf32, #tpu.memory_space<vmem>>, vector<8x128xf32>
    tpu.vector_store %arg2[%c0_0, %c0_1], %11 {strides = array<i32>} : memref<8x128xf32, #tpu.memory_space<vmem>>, vector<8x128xf32>,
    return
  }
  func.func @transform_0(%arg0: i32) -> (i32, i32) {
    %c0_i32 = arith.constant 0 : i32
    %c0_i32_0 = arith.constant 0 : i32
    return %arg0, %c0_i32 : i32, i32
  }
  func.func @transform_1(%arg0: i32) -> (i32, i32) {
    %c0_i32 = arith.constant 0 : i32
    %c0_i32_0 = arith.constant 0 : i32
    return %arg0, %c0_i32 : i32, i32
  }
}

</mosaic_0001>

<llo_original>
// kernel: l1_regularization.1
$region0: #{l1_regularization.1}
  #allocation0 [shape = 'u32[]', space=smem, size = 0x4, offset = 0x4, fixed_abs, tag = 'smem constant byte address 0x4 - core index']
  #allocation1 [shape = 'u32[144,128]{1,0:T(1,128)}', space=vmem, size = 0x12000, scoped, tag = 'internal scratch']
  %s0 = inlined_call_operand.hbm [shape: f32[8,384], index: 0, kind: input, shape index: {}]
  %s1 = inlined_call_operand.vmem [shape: f32[8,128], index: 1, kind: output, shape index: {}]
  %s2 = sld [smem:[#allocation0]]
  $region18: #{l1_regularization.1} parent=0
    _
  %s4 = ssub.s32 1, %s2
  %s5 = scalar_select 0, %s4, %s2
  $region1: #{l1_regularization.1} parent=0
    #allocation2 [shape = 'u8[12288]{0}', space=vmem, size = 0x3000, scoped, tag = 'input window, operand 0, single buffered']
    #allocation3 [shape = 's32[1]{0}', space=sflag, size = 0x4, scoped, tag = 'scoped memory for l1_regularization.1']
    %6 = vsyncpa [#allocation3], 0
    // Predicated region
    $region2: #{l1_regularization.1} parent=1 // pred_check
      _
    $region3: #{l1_regularization.1} parent=1 // pred_check_branch
      %8 = sbr.rel (0) target = $region5
    $region4: #{l1_regularization.1} parent=1 // pred_region
      %s10 = ssub.s32 384, 384
      %11 = vsyncadd [#allocation3], %s10
      %s13 = sshll.u32 [#allocation2], 4
      %s14 = int_to_ptr.vmem [resolvable:$true] %s13
      %16 = dma.hbm_to_vmem [thread:$0]  %s0, 384, %s14, [#allocation3]
    $region5: #{l1_regularization.1} parent=1 // pred_fallthru
      _
    // Predicated region
    $region6: #{l1_regularization.1} parent=1 // pred_check
      _
    $region7: #{l1_regularization.1} parent=1 // pred_check_branch
      %18 = sbr.rel (0) target = $region9
    $region8: #{l1_regularization.1} parent=1 // pred_region
      %19 = dma.done [#allocation3], 384
    $region9: #{l1_regularization.1} parent=1 // pred_fallthru
      _
    %s20 = smul.u32 0, 3
    %s21 = smul.addr %s20, 8
    %s22 = scalar_lea.vmem [#allocation2], %s21
    %v23 = vld [vmem:[%s22] sm:$0xff]
    %v24 = vld [vmem:[%s22 + $0x8] sm:$0xff]
    %v25 = vld [vmem:[%s22 + $0x10] sm:$0xff]
    %v26 = vand.u32 2147483647, %v23
    %v27 = vand.u32 2147483647, %v24
    %v28 = vand.u32 2147483647, %v25
    %v29 = vadd.f32 %v26, 0.0
    %v30 = vadd.f32 %v27, 0.0
    %v31 = vadd.f32 %v28, 0.0
    %v32 = vadd.f32 %v29, %v30
    %v33 = vadd.f32 %v32, %v31
    %34 = vst [vmem:[%s1] sm:$0xff] %v33
    // Predicated region
    $region10: #{l1_regularization.1} parent=1 // pred_check
      _
    $region11: #{l1_regularization.1} parent=1 // pred_check_branch
      %36 = sbr.rel (0) target = $region13
    $region12: #{l1_regularization.1} parent=1 // pred_region
      _
    $region13: #{l1_regularization.1} parent=1 // pred_fallthru
      _
    // Predicated region
    $region14: #{l1_regularization.1} parent=1 // pred_check
      _
    $region15: #{l1_regularization.1} parent=1 // pred_check_branch
      %38 = sbr.rel (0) target = $region17
    $region16: #{l1_regularization.1} parent=1 // pred_region
      _
    $region17: #{l1_regularization.1} parent=1 // pred_fallthru
      _
    %39 = vsyncpa [#allocation3], 1

</llo_original>
